<compile_context>
chip_gen: v6e
topology: v6e:2x2x1
jax: 0.10.0
libtpu: 0.0.40
codegen_flags: <defaults>
</compile_context>

<pallas_src>
import functools
import math

import jax
import jax.numpy as jnp
from jax.experimental import pallas as pl
from jax.experimental.pallas import tpu as pltpu


# ---------------------------------------------------------------------------
# Generation-aware compiler params
# ---------------------------------------------------------------------------
def _vmem_limit_bytes():
    """Leave ~16 MiB headroom: ~112 MiB on 128 MiB parts (v5e/v6e), ~48 MiB on
    64 MiB parts (v7x)."""
    try:
        cap = int(pltpu.get_tpu_info().vmem_capacity_bytes)
    except Exception:
        cap = 64 * 1024 * 1024
    return max(32 * 1024 * 1024, min(cap - 16 * 1024 * 1024, 112 * 1024 * 1024))


_VMEM_LIMIT = None


def _compiler_params():
    global _VMEM_LIMIT
    if _VMEM_LIMIT is None:
        _VMEM_LIMIT = _vmem_limit_bytes()
    return pltpu.CompilerParams(
        dimension_semantics=("parallel",),      # shard 1-D grids across TCs
        vmem_limit_bytes=_VMEM_LIMIT,
    )


def _row_tile(m):
    """Largest row tile (1024/512/256/128) dividing M; small M -> one block;
    large non-aligned M -> 512 with a cdiv grid (edge block padded/masked)."""
    for t in (1024, 512, 256, 128):
        if m % t == 0:
            return t
    if m <= 1024:
        return m
    return 512


# ---------------------------------------------------------------------------
# Single-buffered constant blocks (with runtime fallback)
# ---------------------------------------------------------------------------
_BUFFERED_OK = True


def _const_spec(shape, index_map, buffered):
    """BlockSpec for a grid-invariant block; single-buffer it to halve VMEM."""
    if buffered:
        return pl.BlockSpec(shape, index_map, pipeline_mode=pl.Buffered(1))
    return pl.BlockSpec(shape, index_map)


def _call_with_fallback(build):
    """Try the Buffered(1) variant once; fall back to default double-buffering
    if this jax/libtpu combination rejects it."""
    global _BUFFERED_OK
    if _BUFFERED_OK:
        try:
            return build(True)
        except Exception:
            _BUFFERED_OK = False
    return build(False)


# ---------------------------------------------------------------------------
# Math helpers (used inside kernels only)
# ---------------------------------------------------------------------------
def _layernorm(x, g, b, eps):
    # Matches the reference LayerNorm: torch .std() is unbiased (divide by D-1)
    # and eps is added to the STD (not the variance).  Stats stay in float32.
    mean = jnp.mean(x, axis=-1, keepdims=True)
    diff = x - mean
    var = jnp.sum(diff * diff, axis=-1, keepdims=True) * (1.0 / (x.shape[-1] - 1))
    inv = pl.reciprocal(jnp.sqrt(var) + eps, approx=True)   # EUP slot, not VALU
    return g * diff * inv + b


# ---------------------------------------------------------------------------
# Kernels
# ---------------------------------------------------------------------------
def _ln_qkv_kernel(x_ref, g_ref, b_ref, w_ref, bias_ref, o_ref, *, eps):
    # LayerNorm (f32) + fused QKV projection (bf16 matmul, f32 accumulate).
    y = _layernorm(x_ref[...], g_ref[...], b_ref[...], eps)
    qkv = jnp.dot(y.astype(w_ref.dtype), w_ref[...],
                  preferred_element_type=jnp.float32)
    o_ref[...] = (qkv + bias_ref[...]).astype(o_ref.dtype)


def _attn_ffn_kernel(qkv_ref, x_ref, bias_ref, wo_ref, bo_ref,
                     g2_ref, be2_ref, w1_ref, b1_ref, w2_ref, b2_ref,
                     o_ref, *, n_heads, d_k, eps):
    # One full encoder-layer tail for one batch row:
    #   MHA (heads split in-kernel) -> Wo + residual -> LN + FFN + residual.
    qkv = qkv_ref[0]                       # (S, 3D) bf16
    x = x_ref[0]                           # (S, D)  f32 residual stream
    bias = bias_ref[0]                     # (1, S)  f32 additive key-padding bias
    d_model = n_heads * d_k

    # --- multi-head self-attention (1/sqrt(d_k) already folded into Wq/bq) ---
    heads = []
    for h in range(n_heads):               # static unroll over heads
        lo = h * d_k
        qh = qkv[:, lo:lo + d_k]                                  # (S, d_k)
        kh = qkv[:, d_model + lo:d_model + lo + d_k]              # (S, d_k)
        vh = qkv[:, 2 * d_model + lo:2 * d_model + lo + d_k]      # (S, d_k)
        # q.k^T via contraction on d_k (no explicit k transpose relayout).
        s = jax.lax.dot_general(qh, kh, (((1,), (1,)), ((), ())),
                                preferred_element_type=jnp.float32)   # (S, S)
        s = s + bias                                              # key padding
        m = jnp.max(s, axis=-1, keepdims=True)
        p = jnp.exp(s - m)
        denom = jnp.sum(p, axis=-1, keepdims=True)
        p = p * pl.reciprocal(denom, approx=True)                 # divide on EUP
        heads.append(jnp.dot(p.astype(vh.dtype), vh,
                             preferred_element_type=jnp.float32))  # (S, d_k)
    attn = jnp.concatenate(heads, axis=-1)                        # (S, D) f32

    # --- output projection + residual (fused; lane-dense (S,D) result) ---
    proj = jnp.dot(attn.astype(wo_ref.dtype), wo_ref[...],
                   preferred_element_type=jnp.float32)
    x = x + proj + bo_ref[...]

    # --- LayerNorm + position-wise FFN + residual ---
    # TODO(synk): for very large D/F (e.g. D>=2048, F>=8192) tile the FFN over
    # F with an accumulator; at captioner sizes both weights fit VMEM easily.
    z = _layernorm(x, g2_ref[...], be2_ref[...], eps)
    hmid = jnp.dot(z.astype(w1_ref.dtype), w1_ref[...],
                   preferred_element_type=jnp.float32) + b1_ref[...]
    hmid = jnp.maximum(hmid, 0.0)
    f = jnp.dot(hmid.astype(w2_ref.dtype), w2_ref[...],
                preferred_element_type=jnp.float32) + b2_ref[...]
    o_ref[0] = (x + f).astype(o_ref.dtype)


def _layernorm_kernel(x_ref, g_ref, b_ref, o_ref, *, eps):
    o_ref[...] = _layernorm(x_ref[...], g_ref[...], b_ref[...], eps
                            ).astype(o_ref.dtype)


# ---------------------------------------------------------------------------
# pallas_call wrappers
# ---------------------------------------------------------------------------
def ln_qkv(x2d, g, b, w_qkv, b_qkv, eps=1e-6):
    M, D = x2d.shape
    N = w_qkv.shape[1]
    tm = _row_tile(M)

    def build(buffered):
        return pl.pallas_call(
            functools.partial(_ln_qkv_kernel, eps=eps),
            out_shape=jax.ShapeDtypeStruct((M, N), jnp.bfloat16),
            grid=(pl.cdiv(M, tm),),
            in_specs=[
                pl.BlockSpec((tm, D), lambda i: (i, 0)),
                _const_spec((1, D), lambda i: (0, 0), buffered),
                _const_spec((1, D), lambda i: (0, 0), buffered),
                _const_spec((D, N), lambda i: (0, 0), buffered),
                _const_spec((1, N), lambda i: (0, 0), buffered),
            ],
            out_specs=pl.BlockSpec((tm, N), lambda i: (i, 0)),
            compiler_params=_compiler_params(),
        )(x2d, g.reshape(1, D), b.reshape(1, D), w_qkv, b_qkv.reshape(1, N))

    return _call_with_fallback(build)


def attn_ffn_layer(qkv, x3d, bias, wo, bo, g2, be2, w1, b1, w2, b2,
                   n_heads, eps=1e-6):
    # qkv: (B, S, 3D) bf16, x3d: (B, S, D) f32, bias: (B, 1, S) f32.
    B, S, D = x3d.shape
    F = w1.shape[1]
    d_k = D // n_heads

    def build(buffered):
        return pl.pallas_call(
            functools.partial(_attn_ffn_kernel,
                              n_heads=n_heads, d_k=d_k, eps=eps),
            out_shape=jax.ShapeDtypeStruct((B, S, D), x3d.dtype),
            grid=(B,),
            in_specs=[
                pl.BlockSpec((1, S, 3 * D), lambda b: (b, 0, 0)),
                pl.BlockSpec((1, S, D), lambda b: (b, 0, 0)),
                pl.BlockSpec((1, 1, S), lambda b: (b, 0, 0)),
                _const_spec((D, D), lambda b: (0, 0), buffered),
                _const_spec((1, D), lambda b: (0, 0), buffered),
                _const_spec((1, D), lambda b: (0, 0), buffered),
                _const_spec((1, D), lambda b: (0, 0), buffered),
                _const_spec((D, F), lambda b: (0, 0), buffered),
                _const_spec((1, F), lambda b: (0, 0), buffered),
                _const_spec((F, D), lambda b: (0, 0), buffered),
                _const_spec((1, D), lambda b: (0, 0), buffered),
            ],
            out_specs=pl.BlockSpec((1, S, D), lambda b: (b, 0, 0)),
            input_output_aliases={1: 0},      # residual stream updated in place
            compiler_params=_compiler_params(),
        )(qkv, x3d, bias, wo, bo.reshape(1, D), g2.reshape(1, D),
          be2.reshape(1, D), w1, b1.reshape(1, F), w2, b2.reshape(1, D))

    return _call_with_fallback(build)


def layernorm(x2d, g, b, eps=1e-6):
    M, D = x2d.shape
    tm = _row_tile(M)

    def build(buffered):
        return pl.pallas_call(
            functools.partial(_layernorm_kernel, eps=eps),
            out_shape=jax.ShapeDtypeStruct((M, D), x2d.dtype),
            grid=(pl.cdiv(M, tm),),
            in_specs=[
                pl.BlockSpec((tm, D), lambda i: (i, 0)),
                _const_spec((1, D), lambda i: (0, 0), buffered),
                _const_spec((1, D), lambda i: (0, 0), buffered),
            ],
            out_specs=pl.BlockSpec((tm, D), lambda i: (i, 0)),
            compiler_params=_compiler_params(),
        )(x2d, g.reshape(1, D), b.reshape(1, D))

    return _call_with_fallback(build)


# ---------------------------------------------------------------------------
# Parameter init (deterministic, torch.nn.Linear-style uniform init)
# ---------------------------------------------------------------------------
def _dense_init(key, fan_in, fan_out):
    k1, k2 = jax.random.split(key)
    lim = 1.0 / math.sqrt(fan_in)
    w = jax.random.uniform(k1, (fan_in, fan_out), jnp.float32, -lim, lim)
    b = jax.random.uniform(k2, (fan_out,), jnp.float32, -lim, lim)
    return w, b


def init_encoder_params(key, n_layers, d_model, d_ff, n_heads,
                        w_dtype=jnp.bfloat16):
    keys = jax.random.split(key, n_layers)
    q_scale = 1.0 / math.sqrt(d_model // n_heads)  # folded into Wq/bq (free)
    layers = []
    for i in range(n_layers):
        ks = jax.random.split(keys[i], 6)
        wq, bq = _dense_init(ks[0], d_model, d_model)
        wk, bk = _dense_init(ks[1], d_model, d_model)
        wv, bv = _dense_init(ks[2], d_model, d_model)
        wo, bo = _dense_init(ks[3], d_model, d_model)
        w1, b1 = _dense_init(ks[4], d_model, d_ff)
        w2, b2 = _dense_init(ks[5], d_ff, d_model)
        wq = wq * q_scale
        bq = bq * q_scale
        layers.append({
            "ln1_g": jnp.ones((d_model,), jnp.float32),
            "ln1_b": jnp.zeros((d_model,), jnp.float32),
            "wqkv": jnp.concatenate([wq, wk, wv], axis=1).astype(w_dtype),
            "bqkv": jnp.concatenate([bq, bk, bv]).astype(jnp.float32),
            "wo": wo.astype(w_dtype), "bo": bo.astype(jnp.float32),
            "ln2_g": jnp.ones((d_model,), jnp.float32),
            "ln2_b": jnp.zeros((d_model,), jnp.float32),
            "w1": w1.astype(w_dtype), "b1": b1.astype(jnp.float32),
            "w2": w2.astype(w_dtype), "b2": b2.astype(jnp.float32),
        })
    final = {"g": jnp.ones((d_model,), jnp.float32),
             "b": jnp.zeros((d_model,), jnp.float32)}
    return layers, final


# ---------------------------------------------------------------------------
# Encoder forward (stack of N layers + final LayerNorm)
# ---------------------------------------------------------------------------
# TODO(synk): `layer` is injected into the PyTorch Encoder; the standard
# Annotated-Transformer EncoderLayer (pre-norm MHA + FFN, eval-mode dropout)
# is assumed here since its definition is not part of the given snippet.
def encoder_forward(x, mask, layer_params, final_params, n_heads, eps=1e-6):
    B, S, D = x.shape

    # Key-padding mask (B,S) or (B,1,S) -> additive bias; matches
    # masked_fill(mask == 0, -1e9) broadcast over heads and queries.
    # TODO(synk): a general per-query (B,S,S) mask would need a (1,S,S) bias
    # block per batch; this captioner only uses a region-padding mask.
    if mask.ndim == 3:
        mask = mask[:, 0, :]
    bias = jnp.where(mask == 0, jnp.float32(-1e9),
                     jnp.float32(0.0)).reshape(B, 1, S)

    x3d = x.astype(jnp.float32)
    for p in layer_params:
        # --- LN + fused QKV projection (row-tiled over B*S) ---
        qkv = ln_qkv(x3d.reshape(B * S, D), p["ln1_g"], p["ln1_b"],
                     p["wqkv"], p["bqkv"], eps).reshape(B, S, 3 * D)
        # --- fused: MHA (in-kernel head split) + Wo + residual + LN + FFN + residual ---
        x3d = attn_ffn_layer(qkv, x3d, bias, p["wo"], p["bo"],
                             p["ln2_g"], p["ln2_b"], p["w1"], p["b1"],
                             p["w2"], p["b2"], n_heads, eps)

    # final Encoder.norm
    out = layernorm(x3d.reshape(B * S, D), final_params["g"],
                    final_params["b"], eps)
    return out.reshape(B, S, D)


# ---------------------------------------------------------------------------
if __name__ == "__main__":
    B, S, D = 2, 8, 32          # batch, sequence, d_model
    n_heads, d_ff, n_layers = 4, 64, 2

    root = jax.random.PRNGKey(0)
    k_x, k_p = jax.random.split(root)

    x = jax.random.normal(k_x, (B, S, D), jnp.float32)

    # padding mask: sample 0 masks the last 2 keys, sample 1 is fully valid
    mask = jnp.array([[1.0] * (S - 2) + [0.0] * 2,
                      [1.0] * S], jnp.float32)          # (B, S)

    layer_params, final_params = init_encoder_params(
        k_p, n_layers, D, d_ff, n_heads)

    out = encoder_forward(x, mask, layer_params, final_params, n_heads)
    out = jax.block_until_ready(out)
    assert out.shape == (B, S, D) and out.dtype == jnp.float32
    assert bool(jnp.all(jnp.isfinite(out)))
    print("KERNEL_OK")
</pallas_src>

<mosaic_0001>
module attributes {stable_mosaic.version = 11 : i64} {
  func.func @_ln_qkv_kernel(%arg0: i32, %arg1: memref<16x32xf32, #tpu.memory_space<vmem>>, %arg2: memref<1x32xf32, #tpu.memory_space<vmem>>, %arg3: memref<1x32xf32, #tpu.memory_space<vmem>>, %arg4: memref<32x96xbf16, #tpu.memory_space<vmem>>, %arg5: memref<1x96xf32, #tpu.memory_space<vmem>>, %arg6: memref<16x96xbf16, #tpu.memory_space<vmem>>) attributes {dimension_semantics = [#tpu.dimension_semantics<parallel>], iteration_bounds = array<i64: 1>, scalar_prefetch = 0 : i64, scratch_operands = 0 : i64, tpu.core_type = #tpu.core_type<tc>, window_params = [{transform_indices = @transform_0, window_bounds = array<i64: 16, 32>}, {pipeline_mode = #tpu.pipeline_mode<synchronous>, transform_indices = @transform_1, window_bounds = array<i64: 1, 32>}, {pipeline_mode = #tpu.pipeline_mode<synchronous>, transform_indices = @transform_2, window_bounds = array<i64: 1, 32>}, {pipeline_mode = #tpu.pipeline_mode<synchronous>, transform_indices = @transform_3, window_bounds = array<i64: 32, 96>}, {pipeline_mode = #tpu.pipeline_mode<synchronous>, transform_indices = @transform_4, window_bounds = array<i64: 1, 96>}, {transform_indices = @transform_5, window_bounds = array<i64: 16, 96>}]} {
    %c0 = arith.constant 0 : index
    %c0_0 = arith.constant 0 : index
    %0 = vector.load %arg1[%c0, %c0_0] : memref<16x32xf32, #tpu.memory_space<vmem>>, vector<16x32xf32>
    %c0_1 = arith.constant 0 : index
    %c0_2 = arith.constant 0 : index
    %1 = vector.load %arg2[%c0_1, %c0_2] : memref<1x32xf32, #tpu.memory_space<vmem>>, vector<1x32xf32>
    %c0_3 = arith.constant 0 : index
    %c0_4 = arith.constant 0 : index
    %2 = vector.load %arg3[%c0_3, %c0_4] : memref<1x32xf32, #tpu.memory_space<vmem>>, vector<1x32xf32>
    %cst = arith.constant dense<0.000000e+00> : vector<16xf32>
    %3 = vector.multi_reduction <add>, %0, %cst [1] : vector<16x32xf32> to vector<16xf32>
    %4 = vector.shape_cast %3 : vector<16xf32> to vector<16x1xf32>
    %cst_5 = arith.constant 3.200000e+01 : f32
    %5 = vector.broadcast %cst_5 : f32 to vector<16x1xf32>
    %6 = arith.divf %4, %5 : vector<16x1xf32>
    %7 = vector.broadcast %6 : vector<16x1xf32> to vector<16x32xf32>
    %8 = arith.subf %0, %7 : vector<16x32xf32>
    %9 = arith.mulf %8, %8 : vector<16x32xf32>
    %cst_6 = arith.constant dense<0.000000e+00> : vector<16xf32>
    %10 = vector.multi_reduction <add>, %9, %cst_6 [1] : vector<16x32xf32> to vector<16xf32>
    %11 = vector.shape_cast %10 : vector<16xf32> to vector<16x1xf32>
    %cst_7 = arith.constant 0.0322580636 : f32
    %12 = vector.broadcast %cst_7 : f32 to vector<16x1xf32>
    %13 = arith.mulf %11, %12 : vector<16x1xf32>
    %14 = math.sqrt %13 : vector<16x1xf32>
    %cst_8 = arith.constant 9.99999997E-7 : f32
    %15 = vector.broadcast %cst_8 : f32 to vector<16x1xf32>
    %16 = arith.addf %14, %15 : vector<16x1xf32>
    %17 = tpu.reciprocal %16 {approx = true} : vector<16x1xf32> -> vector<16x1xf32>
    %18 = vector.broadcast %1 : vector<1x32xf32> to vector<16x32xf32>
    %19 = arith.mulf %18, %8 : vector<16x32xf32>
    %20 = vector.broadcast %17 : vector<16x1xf32> to vector<16x32xf32>
    %21 = arith.mulf %19, %20 : vector<16x32xf32>
    %22 = vector.broadcast %2 : vector<1x32xf32> to vector<16x32xf32>
    %23 = arith.addf %21, %22 : vector<16x32xf32>
    %24 = arith.truncf %23 : vector<16x32xf32> to vector<16x32xbf16>
    %c0_9 = arith.constant 0 : index
    %c0_10 = arith.constant 0 : index
    %25 = vector.load %arg4[%c0_9, %c0_10] : memref<32x96xbf16, #tpu.memory_space<vmem>>, vector<32x96xbf16>
    %cst_11 = arith.constant dense<0.000000e+00> : vector<16x96xf32>
    %26 = tpu.matmul %24, %25, %cst_11 {dimension_numbers = #tpu.dot_dimension_numbers<[1], [0], [0], [1], [0, 0, 1, 1], [], []>} : vector<16x32xbf16>, vector<32x96xbf16>, vector<16x96xf32> -> vector<16x96xf32>
    %c0_12 = arith.constant 0 : index
    %c0_13 = arith.constant 0 : index
    %27 = vector.load %arg5[%c0_12, %c0_13] : memref<1x96xf32, #tpu.memory_space<vmem>>, vector<1x96xf32>
    %28 = vector.broadcast %27 : vector<1x96xf32> to vector<16x96xf32>
    %29 = arith.addf %26, %28 : vector<16x96xf32>
    %30 = arith.truncf %29 : vector<16x96xf32> to vector<16x96xbf16>
    %c0_14 = arith.constant 0 : index
    %c0_15 = arith.constant 0 : index
    %31 = vector.load %arg6[%c0_14, %c0_15] : memref<16x96xbf16, #tpu.memory_space<vmem>>, vector<16x96xbf16>
    tpu.vector_store %arg6[%c0_14, %c0_15], %30 {strides = array<i32>} : memref<16x96xbf16, #tpu.memory_space<vmem>>, vector<16x96xbf16>,
    return
  }
  func.func @transform_0(%arg0: i32) -> (i32, i32) {
    %c0_i32 = arith.constant 0 : i32
    %c0_i32_0 = arith.constant 0 : i32
    return %arg0, %c0_i32 : i32, i32
  }
  func.func @transform_1(%arg0: i32) -> (i32, i32) {
    %c0_i32 = arith.constant 0 : i32
    %c0_i32_0 = arith.constant 0 : i32
    %c0_i32_1 = arith.constant 0 : i32
    return %c0_i32, %c0_i32_0 : i32, i32
  }
  func.func @transform_2(%arg0: i32) -> (i32, i32) {
    %c0_i32 = arith.constant 0 : i32
    %c0_i32_0 = arith.constant 0 : i32
    %c0_i32_1 = arith.constant 0 : i32
    return %c0_i32, %c0_i32_0 : i32, i32
  }
  func.func @transform_3(%arg0: i32) -> (i32, i32) {
    %c0_i32 = arith.constant 0 : i32
    %c0_i32_0 = arith.constant 0 : i32
    %c0_i32_1 = arith.constant 0 : i32
    return %c0_i32, %c0_i32_0 : i32, i32
  }
  func.func @transform_4(%arg0: i32) -> (i32, i32) {
    %c0_i32 = arith.constant 0 : i32
    %c0_i32_0 = arith.constant 0 : i32
    %c0_i32_1 = arith.constant 0 : i32
    return %c0_i32, %c0_i32_0 : i32, i32
  }
  func.func @transform_5(%arg0: i32) -> (i32, i32) {
    %c0_i32 = arith.constant 0 : i32
    %c0_i32_0 = arith.constant 0 : i32
    return %arg0, %c0_i32 : i32, i32
  }
}

module attributes {stable_mosaic.version = 11 : i64} {
  func.func @_ln_qkv_kernel(%arg0: i32, %arg1: memref<16x32xf32, #tpu.memory_space<vmem>>, %arg2: memref<1x32xf32, #tpu.memory_space<vmem>>, %arg3: memref<1x32xf32, #tpu.memory_space<vmem>>, %arg4: memref<32x96xbf16, #tpu.memory_space<vmem>>, %arg5: memref<1x96xf32, #tpu.memory_space<vmem>>, %arg6: memref<16x96xbf16, #tpu.memory_space<vmem>>) attributes {dimension_semantics = [#tpu.dimension_semantics<parallel>], iteration_bounds = array<i64: 1>, scalar_prefetch = 0 : i64, scratch_operands = 0 : i64, tpu.core_type = #tpu.core_type<tc>, window_params = [{transform_indices = @transform_0, window_bounds = array<i64: 16, 32>}, {pipeline_mode = #tpu.pipeline_mode<synchronous>, transform_indices = @transform_1, window_bounds = array<i64: 1, 32>}, {pipeline_mode = #tpu.pipeline_mode<synchronous>, transform_indices = @transform_2, window_bounds = array<i64: 1, 32>}, {pipeline_mode = #tpu.pipeline_mode<synchronous>, transform_indices = @transform_3, window_bounds = array<i64: 32, 96>}, {pipeline_mode = #tpu.pipeline_mode<synchronous>, transform_indices = @transform_4, window_bounds = array<i64: 1, 96>}, {transform_indices = @transform_5, window_bounds = array<i64: 16, 96>}]} {
    %c0 = arith.constant 0 : index
    %c0_0 = arith.constant 0 : index
    %0 = vector.load %arg1[%c0, %c0_0] : memref<16x32xf32, #tpu.memory_space<vmem>>, vector<16x32xf32>
    %c0_1 = arith.constant 0 : index
    %c0_2 = arith.constant 0 : index
    %1 = vector.load %arg2[%c0_1, %c0_2] : memref<1x32xf32, #tpu.memory_space<vmem>>, vector<1x32xf32>
    %c0_3 = arith.constant 0 : index
    %c0_4 = arith.constant 0 : index
    %2 = vector.load %arg3[%c0_3, %c0_4] : memref<1x32xf32, #tpu.memory_space<vmem>>, vector<1x32xf32>
    %cst = arith.constant dense<0.000000e+00> : vector<16xf32>
    %3 = vector.multi_reduction <add>, %0, %cst [1] : vector<16x32xf32> to vector<16xf32>
    %4 = vector.shape_cast %3 : vector<16xf32> to vector<16x1xf32>
    %cst_5 = arith.constant 3.200000e+01 : f32
    %5 = vector.broadcast %cst_5 : f32 to vector<16x1xf32>
    %6 = arith.divf %4, %5 : vector<16x1xf32>
    %7 = vector.broadcast %6 : vector<16x1xf32> to vector<16x32xf32>
    %8 = arith.subf %0, %7 : vector<16x32xf32>
    %9 = arith.mulf %8, %8 : vector<16x32xf32>
    %cst_6 = arith.constant dense<0.000000e+00> : vector<16xf32>
    %10 = vector.multi_reduction <add>, %9, %cst_6 [1] : vector<16x32xf32> to vector<16xf32>
    %11 = vector.shape_cast %10 : vector<16xf32> to vector<16x1xf32>
    %cst_7 = arith.constant 0.0322580636 : f32
    %12 = vector.broadcast %cst_7 : f32 to vector<16x1xf32>
    %13 = arith.mulf %11, %12 : vector<16x1xf32>
    %14 = math.sqrt %13 : vector<16x1xf32>
    %cst_8 = arith.constant 9.99999997E-7 : f32
    %15 = vector.broadcast %cst_8 : f32 to vector<16x1xf32>
    %16 = arith.addf %14, %15 : vector<16x1xf32>
    %17 = tpu.reciprocal %16 {approx = true} : vector<16x1xf32> -> vector<16x1xf32>
    %18 = vector.broadcast %1 : vector<1x32xf32> to vector<16x32xf32>
    %19 = arith.mulf %18, %8 : vector<16x32xf32>
    %20 = vector.broadcast %17 : vector<16x1xf32> to vector<16x32xf32>
    %21 = arith.mulf %19, %20 : vector<16x32xf32>
    %22 = vector.broadcast %2 : vector<1x32xf32> to vector<16x32xf32>
    %23 = arith.addf %21, %22 : vector<16x32xf32>
    %24 = arith.truncf %23 : vector<16x32xf32> to vector<16x32xbf16>
    %c0_9 = arith.constant 0 : index
    %c0_10 = arith.constant 0 : index
    %25 = vector.load %arg4[%c0_9, %c0_10] : memref<32x96xbf16, #tpu.memory_space<vmem>>, vector<32x96xbf16>
    %cst_11 = arith.constant dense<0.000000e+00> : vector<16x96xf32>
    %26 = tpu.matmul %24, %25, %cst_11 {dimension_numbers = #tpu.dot_dimension_numbers<[1], [0], [0], [1], [0, 0, 1, 1], [], []>} : vector<16x32xbf16>, vector<32x96xbf16>, vector<16x96xf32> -> vector<16x96xf32>
    %c0_12 = arith.constant 0 : index
    %c0_13 = arith.constant 0 : index
    %27 = vector.load %arg5[%c0_12, %c0_13] : memref<1x96xf32, #tpu.memory_space<vmem>>, vector<1x96xf32>
    %28 = vector.broadcast %27 : vector<1x96xf32> to vector<16x96xf32>
    %29 = arith.addf %26, %28 : vector<16x96xf32>
    %30 = arith.truncf %29 : vector<16x96xf32> to vector<16x96xbf16>
    %c0_14 = arith.constant 0 : index
    %c0_15 = arith.constant 0 : index
    %31 = vector.load %arg6[%c0_14, %c0_15] : memref<16x96xbf16, #tpu.memory_space<vmem>>, vector<16x96xbf16>
    tpu.vector_store %arg6[%c0_14, %c0_15], %30 {strides = array<i32>} : memref<16x96xbf16, #tpu.memory_space<vmem>>, vector<16x96xbf16>,
    return
  }
  func.func @transform_0(%arg0: i32) -> (i32, i32) {
    %c0_i32 = arith.constant 0 : i32
    %c0_i32_0 = arith.constant 0 : i32
    return %arg0, %c0_i32 : i32, i32
  }
  func.func @transform_1(%arg0: i32) -> (i32, i32) {
    %c0_i32 = arith.constant 0 : i32
    %c0_i32_0 = arith.constant 0 : i32
    %c0_i32_1 = arith.constant 0 : i32
    return %c0_i32, %c0_i32_0 : i32, i32
  }
  func.func @transform_2(%arg0: i32) -> (i32, i32) {
    %c0_i32 = arith.constant 0 : i32
    %c0_i32_0 = arith.constant 0 : i32
    %c0_i32_1 = arith.constant 0 : i32
    return %c0_i32, %c0_i32_0 : i32, i32
  }
  func.func @transform_3(%arg0: i32) -> (i32, i32) {
    %c0_i32 = arith.constant 0 : i32
    %c0_i32_0 = arith.constant 0 : i32
    %c0_i32_1 = arith.constant 0 : i32
    return %c0_i32, %c0_i32_0 : i32, i32
  }
  func.func @transform_4(%arg0: i32) -> (i32, i32) {
    %c0_i32 = arith.constant 0 : i32
    %c0_i32_0 = arith.constant 0 : i32
    %c0_i32_1 = arith.constant 0 : i32
    return %c0_i32, %c0_i32_0 : i32, i32
  }
  func.func @transform_5(%arg0: i32) -> (i32, i32) {
    %c0_i32 = arith.constant 0 : i32
    %c0_i32_0 = arith.constant 0 : i32
    return %arg0, %c0_i32 : i32, i32
  }
}

</mosaic_0001>

<llo_original>
// kernel: tpu_custom_call.1
$region0: #{tpu_custom_call.1}
  #allocation0 [shape = 'u32[]', space=smem, size = 0x4, offset = 0x4, fixed_abs, tag = 'smem constant byte address 0x4 - core index']
  #allocation1 [shape = 'u32[144,128]{1,0:T(1,128)}', space=vmem, size = 0x12000, scoped, tag = 'internal scratch']
  %s0 = inlined_call_operand.hbm [shape: f32[16,32], index: 0, kind: input, shape index: {}]
  %s1 = inlined_call_operand.vmem [shape: f32[1,32], index: 1, kind: input, shape index: {}]
  %s2 = inlined_call_operand.vmem [shape: f32[1,32], index: 2, kind: input, shape index: {}]
  %s3 = inlined_call_operand.hbm [shape: bf16[32,96], index: 3, kind: input, shape index: {}]
  %s4 = inlined_call_operand.vmem [shape: f32[1,96], index: 4, kind: input, shape index: {}]
  %s5 = inlined_call_operand.hbm [shape: bf16[16,96], index: 5, kind: output, shape index: {}]
  %s6 = sld [smem:[#allocation0]]
  $region38: #{tpu_custom_call.1} parent=0
    _
  %s8 = ssub.s32 1, %s6
  %s9 = scalar_select 0, %s8, %s6
  $region1: #{tpu_custom_call.1} parent=0
    #allocation2 [shape = 'u8[8192]{0}', space=vmem, size = 0x2000, scoped, tag = 'input window, operand 0, single buffered']
    #allocation3 [shape = 's32[1]{0}', space=sflag, size = 0x4, scoped, tag = 'scoped memory for tpu_custom_call.1']
    #allocation4 [shape = 's32[1]{0}', space=sflag, size = 0x4, scoped, tag = 'scoped memory for tpu_custom_call.1']
    #allocation5 [shape = 'u8[8192]{0}', space=vmem, size = 0x2000, scoped, tag = 'input window, operand 3, single buffered']
    #allocation6 [shape = 's32[1]{0}', space=sflag, size = 0x4, scoped, tag = 'scoped memory for tpu_custom_call.1']
    #allocation7 [shape = 'u8[4096]{0}', space=vmem, size = 0x1000, scoped, tag = 'output window, operand 0, single buffered']
    %10 = vsyncpa [#allocation3], 0
    %11 = vsyncpa [#allocation6], 0
    %12 = vsyncpa [#allocation4], 0
    // Predicated region
    $region2: #{tpu_custom_call.1} parent=1 // pred_check
      _
    $region3: #{tpu_custom_call.1} parent=1 // pred_check_branch
      %14 = sbr.rel (0) target = $region5
    $region4: #{tpu_custom_call.1} parent=1 // pred_region
      %s16 = ssub.s32 256, 256
      %17 = vsyncadd [#allocation3], %s16
      %s18 = sshll.u32 [#allocation2], 4
      %s19 = int_to_ptr.vmem [resolvable:$true] %s18
      %24 = dma.hbm_to_vmem [thread:$0]  %s0, 256, %s19, [#allocation3], 128, 128, 8
    $region5: #{tpu_custom_call.1} parent=1 // pred_fallthru
      _
    // Predicated region
    $region6: #{tpu_custom_call.1} parent=1 // pred_check
      _
    $region7: #{tpu_custom_call.1} parent=1 // pred_check_branch
      %26 = sbr.rel (0) target = $region9
    $region8: #{tpu_custom_call.1} parent=1 // pred_region
      _
    $region9: #{tpu_custom_call.1} parent=1 // pred_fallthru
      _
    // Predicated region
    $region10: #{tpu_custom_call.1} parent=1 // pred_check
      _
    $region11: #{tpu_custom_call.1} parent=1 // pred_check_branch
      %28 = sbr.rel (0) target = $region13
    $region12: #{tpu_custom_call.1} parent=1 // pred_region
      _
    $region13: #{tpu_custom_call.1} parent=1 // pred_fallthru
      _
    // Predicated region
    $region14: #{tpu_custom_call.1} parent=1 // pred_check
      _
    $region15: #{tpu_custom_call.1} parent=1 // pred_check_branch
      %30 = sbr.rel (0) target = $region17
    $region16: #{tpu_custom_call.1} parent=1 // pred_region
      %s32 = ssub.s32 256, 256
      %33 = vsyncadd [#allocation6], %s32
      %s34 = sshll.u32 [#allocation5], 4
      %s35 = int_to_ptr.vmem [resolvable:$true] %s34
      %40 = dma.hbm_to_vmem [thread:$0]  %s3, 256, %s35, [#allocation6], 64, 64, 4
    $region17: #{tpu_custom_call.1} parent=1 // pred_fallthru
      _
    // Predicated region
    $region18: #{tpu_custom_call.1} parent=1 // pred_check
      _
    $region19: #{tpu_custom_call.1} parent=1 // pred_check_branch
      %42 = sbr.rel (0) target = $region21
    $region20: #{tpu_custom_call.1} parent=1 // pred_region
      _
    $region21: #{tpu_custom_call.1} parent=1 // pred_fallthru
      _
    // Predicated region
    $region22: #{tpu_custom_call.1} parent=1 // pred_check
      _
    $region23: #{tpu_custom_call.1} parent=1 // pred_check_branch
      %44 = sbr.rel (0) target = $region25
    $region24: #{tpu_custom_call.1} parent=1 // pred_region
      %45 = dma.done [#allocation3], 256
    $region25: #{tpu_custom_call.1} parent=1 // pred_fallthru
      _
    // Predicated region
    $region26: #{tpu_custom_call.1} parent=1 // pred_check
      _
    $region27: #{tpu_custom_call.1} parent=1 // pred_check_branch
      %47 = sbr.rel (0) target = $region29
    $region28: #{tpu_custom_call.1} parent=1 // pred_region
      %48 = dma.done [#allocation6], 256
    $region29: #{tpu_custom_call.1} parent=1 // pred_fallthru
      _
    %v50 = vld [vmem:[#allocation2] sm:$0xff]
    %v51 = vld [vmem:[#allocation2 + $0x8] sm:$0xff]
    %v52 = vld [vmem:[%s1] sm:$0x1]
    %v53 = vld [vmem:[%s2] sm:$0x1]
    %vm54 = vcmask 261120
    %v55 = vsel %vm54, %v50, 0.0
    %56 = vadd.xlane.f32.xlu0 %v55
    %v57 = vpop.xlane.xlu0 %56
    %v58 = vsel %vm54, %v51, 0.0
    %59 = vadd.xlane.f32.xlu0 %v58
    %v60 = vpop.xlane.xlu0 %59
    %v61 = vrcp.pop 32.0
    %v62 = vmul.f32 %v57, %v61
    %v63 = vmul.f32 %v60, %v61
    %v64 = vsub.f32 %v50, %v62
    %v65 = vsub.f32 %v51, %v63
    %v66 = vmul.f32 %v64, %v64
    %v67 = vmul.f32 %v65, %v65
    %v68 = vsel %vm54, %v66, 0.0
    %69 = vadd.xlane.f32.xlu0 %v68
    %v70 = vpop.xlane.xlu0 %69
    %v71 = vsel %vm54, %v67, 0.0
    %72 = vadd.xlane.f32.xlu0 %v71
    %v73 = vpop.xlane.xlu0 %72
    %v74 = vmul.f32 %v70, 0.032258064
    %v75 = vmul.f32 %v73, 0.032258064
    %v76 = vrsqrt.pop %v74
    %v77 = vmul.f32 %v74, %v76
    %vm78 = vcmp.eq.f32.partialorder %v74, inf
    %v79 = vsel %vm78, %v74, %v77
    %vm80 = vcmp.eq.f32.partialorder %v74, 0.0
    %v81 = vand.u32 %v74, 2147483648
    %v82 = vsel %vm80, %v81, %v79
    %v83 = vrsqrt.pop %v75
    %v84 = vmul.f32 %v75, %v83
    %vm85 = vcmp.eq.f32.partialorder %v75, inf
    %v86 = vsel %vm85, %v75, %v84
    %vm87 = vcmp.eq.f32.partialorder %v75, 0.0
    %v88 = vand.u32 %v75, 2147483648
    %v89 = vsel %vm87, %v88, %v86
    %v90 = vadd.f32 %v82, 1e-06
    %v91 = vadd.f32 %v89, 1e-06
    %v92 = vrcp.pop %v90
    %v93 = vrcp.pop %v91
    %v95 = vlaneseq
    %v96 = vshrl.u32 %v95, 7
    %v97 = vsub.s32 0, %v96
    %v98 = vrot.slane %v52, %v97
    %v100 = vmul.f32 %v98, %v64
    %v101 = vmul.f32 %v98, %v65
    %v102 = vmul.f32 %v100, %v92
    %v103 = vmul.f32 %v101, %v93
    %v105 = vlaneseq
    %v106 = vshrl.u32 %v105, 7
    %v107 = vsub.s32 0, %v106
    %v108 = vrot.slane %v53, %v107
    %v110 = vadd.f32 %v102, %v108
    %v111 = vadd.f32 %v103, %v108
    %v112 = vpack.c.bf16 %v111, %v110
    %v113 = vld [vmem:[#allocation5] sm:$0xf]
    %v114 = vld [vmem:[#allocation5 + $0x4] sm:$0xf]
    %v115 = vld [vmem:[#allocation5 + $0x8] sm:$0xf]
    %v116 = vld [vmem:[#allocation5 + $0xc] sm:$0xf]
    %v117 = vld [vmem:[%s4] sm:$0x1]
    %v119 = vlaneseq
    %v120 = vshrl.u32 %v119, 7
    %v121 = vsub.s32 0, %v120
    %v122 = vrot.slane %v117, %v121
    %v128 = vunpack.c.l.b16 %v113
    %v129 = vunpack.c.l.b16 %v114
    %v130 = vunpack.c.l.b16 %v115
    %v131 = vunpack.c.l.b16 %v116
    %v132 = vpack.c.b16 %v129, %v128
    %v133 = vpack.c.b16 %v131, %v130
    %v137 = vsel %vm54, %v112, 0
    %139 = vmatprep.subr.bf16.mxu0 0
    %140 = vmatpush1.bf16.msra.mxu0 0
    %141 = vmatprep.subr.bf16.mxu0 0
    %142 = vmatpush1.bf16.msra.mxu0 0
    %143 = vmatprep.subr.bf16.mxu0 0
    %144 = vmatpush1.bf16.msra.mxu0 0
    %145 = vmatprep.subr.bf16.mxu0 0
    %146 = vmatpush1.bf16.msra.mxu0 0
    %147 = vmatprep.subr.bf16.mxu0 0
    %148 = vmatpush1.bf16.msra.mxu0 0
    %149 = vmatprep.subr.bf16.mxu0 0
    %150 = vmatpush1.bf16.msra.mxu0 0
    %151 = vmatprep.subr.bf16.mxu0 0
    %152 = vmatpush1.bf16.msra.mxu0 %v133
    %153 = vmatprep.subr.bf16.mxu0 0
    %154 = vmatpush1.bf16.msra.mxu0 %v132
    %155 = vmatprep.subr.bf16.mxu0 0
    %156 = vmatpush2.bf16.msra.mxu0 0
    %157 = vmatprep.subr.bf16.mxu0 0
    %158 = vmatpush2.bf16.msra.mxu0 0
    %159 = vmatprep.subr.bf16.mxu0 0
    %160 = vmatpush2.bf16.msra.mxu0 0
    %161 = vmatprep.subr.bf16.mxu0 0
    %162 = vmatpush2.bf16.msra.mxu0 0
    %163 = vmatprep.subr.bf16.mxu0 0
    %164 = vmatpush2.bf16.msra.mxu0 0
    %165 = vmatprep.subr.bf16.mxu0 0
    %166 = vmatpush2.bf16.msra.mxu0 0
    %167 = vmatprep.subr.bf16.mxu0 0
    %168 = vmatpush2.bf16.msra.mxu0 0
    %169 = vmatprep.subr.bf16.mxu0 0
    %170 = vmatpush2.bf16.msra.mxu0 0
    %171 = vmatprep.mubr.bf16.mxu0 0
    %172 = vmatmul.mubr.bf16.gmra.mxu0 %v137
    %v173 = vpop.f32.mrf.mxu0
    %v174 = vadd.f32 %v122, %v173
    %v175 = vpop.f32.mrf.mxu0
    %v176 = vpop.f32.mrf.mxu0
    %v177 = vadd.f32 %v122, %v176
    %v178 = vpop.f32.mrf.mxu0
    %179 = vdwg.mxu0
    %v180 = vpack.c.bf16 %v177, %v174
    %v182 = vunpack.c.l.b16 %v180
    %v183 = vunpack.c.h.b16 %v180
    %v184 = vpack.c.b16 %v182, %v182
    %v185 = vpack.c.b16 %v183, %v183
    %vm188 = vcmask 781312
    %189 = vst.msk [vmem:[#allocation7] sm:$0xf] %vm188, %v184
    %190 = vst.msk [vmem:[#allocation7 + $0x4] sm:$0xf] %vm188, %v185
    // Predicated region
    $region30: #{tpu_custom_call.1} parent=1 // pred_check
      _
    $region31: #{tpu_custom_call.1} parent=1 // pred_check_branch
      %192 = sbr.rel (0) target = $region33
    $region32: #{tpu_custom_call.1} parent=1 // pred_region
      %s194 = ssub.s32 128, 128
      %195 = vsyncadd [#allocation4], %s194
      %s196 = sshll.u32 [#allocation7], 4
      %s197 = int_to_ptr.vmem [resolvable:$true] %s196
      %202 = dma.vmem_to_hbm [thread:$0]  %s197, 128, %s5, [#allocation4], 64, 64, 4
    $region33: #{tpu_custom_call.1} parent=1 // pred_fallthru
      _
    // Predicated region
    $region34: #{tpu_custom_call.1} parent=1 // pred_check
      _
    $region35: #{tpu_custom_call.1} parent=1 // pred_check_branch
      %204 = sbr.rel (0) target = $region37
    $region36: #{tpu_custom_call.1} parent=1 // pred_region
      %205 = dma.done [#allocation4], 128
    $region37: #{tpu_custom_call.1} parent=1 // pred_fallthru
      _
    %206 = vsyncpa [#allocation3], 1
    %207 = vsyncpa [#allocation6], 1
    %208 = vsyncpa [#allocation4], 1

// kernel: tpu_custom_call.1
$region0: #{tpu_custom_call.1}
  #allocation0 [shape = 'u32[]', space=smem, size = 0x4, offset = 0x4, fixed_abs, tag = 'smem constant byte address 0x4 - core index']
  #allocation1 [shape = 'u32[144,128]{1,0:T(1,128)}', space=vmem, size = 0x12000, scoped, tag = 'internal scratch']
  %s0 = inlined_call_operand.hbm [shape: f32[16,32], index: 0, kind: input, shape index: {}]
  %s1 = inlined_call_operand.vmem [shape: f32[1,32], index: 1, kind: input, shape index: {}]
  %s2 = inlined_call_operand.vmem [shape: f32[1,32], index: 2, kind: input, shape index: {}]
  %s3 = inlined_call_operand.hbm [shape: bf16[32,96], index: 3, kind: input, shape index: {}]
  %s4 = inlined_call_operand.vmem [shape: f32[1,96], index: 4, kind: input, shape index: {}]
  %s5 = inlined_call_operand.hbm [shape: bf16[16,96], index: 5, kind: output, shape index: {}]
  %s6 = sld [smem:[#allocation0]]
  $region38: #{tpu_custom_call.1} parent=0
    _
  %s8 = ssub.s32 1, %s6
  %s9 = scalar_select 0, %s8, %s6
  $region1: #{tpu_custom_call.1} parent=0
    #allocation2 [shape = 'u8[8192]{0}', space=vmem, size = 0x2000, scoped, tag = 'input window, operand 0, single buffered']
    #allocation3 [shape = 's32[1]{0}', space=sflag, size = 0x4, scoped, tag = 'scoped memory for tpu_custom_call.1']
    #allocation4 [shape = 's32[1]{0}', space=sflag, size = 0x4, scoped, tag = 'scoped memory for tpu_custom_call.1']
    #allocation5 [shape = 'u8[8192]{0}', space=vmem, size = 0x2000, scoped, tag = 'input window, operand 3, single buffered']
    #allocation6 [shape = 's32[1]{0}', space=sflag, size = 0x4, scoped, tag = 'scoped memory for tpu_custom_call.1']
    #allocation7 [shape = 'u8[4096]{0}', space=vmem, size = 0x1000, scoped, tag = 'output window, operand 0, single buffered']
    %10 = vsyncpa [#allocation3], 0
    %11 = vsyncpa [#allocation6], 0
    %12 = vsyncpa [#allocation4], 0
    // Predicated region
    $region2: #{tpu_custom_call.1} parent=1 // pred_check
      _
    $region3: #{tpu_custom_call.1} parent=1 // pred_check_branch
      %14 = sbr.rel (0) target = $region5
    $region4: #{tpu_custom_call.1} parent=1 // pred_region
      %s16 = ssub.s32 256, 256
      %17 = vsyncadd [#allocation3], %s16
      %s18 = sshll.u32 [#allocation2], 4
      %s19 = int_to_ptr.vmem [resolvable:$true] %s18
      %24 = dma.hbm_to_vmem [thread:$0]  %s0, 256, %s19, [#allocation3], 128, 128, 8
    $region5: #{tpu_custom_call.1} parent=1 // pred_fallthru
      _
    // Predicated region
    $region6: #{tpu_custom_call.1} parent=1 // pred_check
      _
    $region7: #{tpu_custom_call.1} parent=1 // pred_check_branch
      %26 = sbr.rel (0) target = $region9
    $region8: #{tpu_custom_call.1} parent=1 // pred_region
      _
    $region9: #{tpu_custom_call.1} parent=1 // pred_fallthru
      _
    // Predicated region
    $region10: #{tpu_custom_call.1} parent=1 // pred_check
      _
    $region11: #{tpu_custom_call.1} parent=1 // pred_check_branch
      %28 = sbr.rel (0) target = $region13
    $region12: #{tpu_custom_call.1} parent=1 // pred_region
      _
    $region13: #{tpu_custom_call.1} parent=1 // pred_fallthru
      _
    // Predicated region
    $region14: #{tpu_custom_call.1} parent=1 // pred_check
      _
    $region15: #{tpu_custom_call.1} parent=1 // pred_check_branch
      %30 = sbr.rel (0) target = $region17
    $region16: #{tpu_custom_call.1} parent=1 // pred_region
      %s32 = ssub.s32 256, 256
      %33 = vsyncadd [#allocation6], %s32
      %s34 = sshll.u32 [#allocation5], 4
      %s35 = int_to_ptr.vmem [resolvable:$true] %s34
      %40 = dma.hbm_to_vmem [thread:$0]  %s3, 256, %s35, [#allocation6], 64, 64, 4
    $region17: #{tpu_custom_call.1} parent=1 // pred_fallthru
      _
    // Predicated region
    $region18: #{tpu_custom_call.1} parent=1 // pred_check
      _
    $region19: #{tpu_custom_call.1} parent=1 // pred_check_branch
      %42 = sbr.rel (0) target = $region21
    $region20: #{tpu_custom_call.1} parent=1 // pred_region
      _
    $region21: #{tpu_custom_call.1} parent=1 // pred_fallthru
      _
    // Predicated region
    $region22: #{tpu_custom_call.1} parent=1 // pred_check
      _
    $region23: #{tpu_custom_call.1} parent=1 // pred_check_branch
      %44 = sbr.rel (0) target = $region25
    $region24: #{tpu_custom_call.1} parent=1 // pred_region
      %45 = dma.done [#allocation3], 256
    $region25: #{tpu_custom_call.1} parent=1 // pred_fallthru
      _
    // Predicated region
    $region26: #{tpu_custom_call.1} parent=1 // pred_check
      _
    $region27: #{tpu_custom_call.1} parent=1 // pred_check_branch
      %47 = sbr.rel (0) target = $region29
    $region28: #{tpu_custom_call.1} parent=1 // pred_region
      %48 = dma.done [#allocation6], 256
    $region29: #{tpu_custom_call.1} parent=1 // pred_fallthru
      _
    %v50 = vld [vmem:[#allocation2] sm:$0xff]
    %v51 = vld [vmem:[#allocation2 + $0x8] sm:$0xff]
    %v52 = vld [vmem:[%s1] sm:$0x1]
    %v53 = vld [vmem:[%s2] sm:$0x1]
    %vm54 = vcmask 261120
    %v55 = vsel %vm54, %v50, 0.0
    %56 = vadd.xlane.f32.xlu0 %v55
    %v57 = vpop.xlane.xlu0 %56
    %v58 = vsel %vm54, %v51, 0.0
    %59 = vadd.xlane.f32.xlu0 %v58
    %v60 = vpop.xlane.xlu0 %59
    %v61 = vrcp.pop 32.0
    %v62 = vmul.f32 %v57, %v61
    %v63 = vmul.f32 %v60, %v61
    %v64 = vsub.f32 %v50, %v62
    %v65 = vsub.f32 %v51, %v63
    %v66 = vmul.f32 %v64, %v64
    %v67 = vmul.f32 %v65, %v65
    %v68 = vsel %vm54, %v66, 0.0
    %69 = vadd.xlane.f32.xlu0 %v68
    %v70 = vpop.xlane.xlu0 %69
    %v71 = vsel %vm54, %v67, 0.0
    %72 = vadd.xlane.f32.xlu0 %v71
    %v73 = vpop.xlane.xlu0 %72
    %v74 = vmul.f32 %v70, 0.032258064
    %v75 = vmul.f32 %v73, 0.032258064
    %v76 = vrsqrt.pop %v74
    %v77 = vmul.f32 %v74, %v76
    %vm78 = vcmp.eq.f32.partialorder %v74, inf
    %v79 = vsel %vm78, %v74, %v77
    %vm80 = vcmp.eq.f32.partialorder %v74, 0.0
    %v81 = vand.u32 %v74, 2147483648
    %v82 = vsel %vm80, %v81, %v79
    %v83 = vrsqrt.pop %v75
    %v84 = vmul.f32 %v75, %v83
    %vm85 = vcmp.eq.f32.partialorder %v75, inf
    %v86 = vsel %vm85, %v75, %v84
    %vm87 = vcmp.eq.f32.partialorder %v75, 0.0
    %v88 = vand.u32 %v75, 2147483648
    %v89 = vsel %vm87, %v88, %v86
    %v90 = vadd.f32 %v82, 1e-06
    %v91 = vadd.f32 %v89, 1e-06
    %v92 = vrcp.pop %v90
    %v93 = vrcp.pop %v91
    %v95 = vlaneseq
    %v96 = vshrl.u32 %v95, 7
    %v97 = vsub.s32 0, %v96
    %v98 = vrot.slane %v52, %v97
    %v100 = vmul.f32 %v98, %v64
    %v101 = vmul.f32 %v98, %v65
    %v102 = vmul.f32 %v100, %v92
    %v103 = vmul.f32 %v101, %v93
    %v105 = vlaneseq
    %v106 = vshrl.u32 %v105, 7
    %v107 = vsub.s32 0, %v106
    %v108 = vrot.slane %v53, %v107
    %v110 = vadd.f32 %v102, %v108
    %v111 = vadd.f32 %v103, %v108
    %v112 = vpack.c.bf16 %v111, %v110
    %v113 = vld [vmem:[#allocation5] sm:$0xf]
    %v114 = vld [vmem:[#allocation5 + $0x4] sm:$0xf]
    %v115 = vld [vmem:[#allocation5 + $0x8] sm:$0xf]
    %v116 = vld [vmem:[#allocation5 + $0xc] sm:$0xf]
    %v117 = vld [vmem:[%s4] sm:$0x1]
    %v119 = vlaneseq
    %v120 = vshrl.u32 %v119, 7
    %v121 = vsub.s32 0, %v120
    %v122 = vrot.slane %v117, %v121
    %v128 = vunpack.c.l.b16 %v113
    %v129 = vunpack.c.l.b16 %v114
    %v130 = vunpack.c.l.b16 %v115
    %v131 = vunpack.c.l.b16 %v116
    %v132 = vpack.c.b16 %v129, %v128
    %v133 = vpack.c.b16 %v131, %v130
    %v137 = vsel %vm54, %v112, 0
    %139 = vmatprep.subr.bf16.mxu0 0
    %140 = vmatpush1.bf16.msra.mxu0 0
    %141 = vmatprep.subr.bf16.mxu0 0
    %142 = vmatpush1.bf16.msra.mxu0 0
    %143 = vmatprep.subr.bf16.mxu0 0
    %144 = vmatpush1.bf16.msra.mxu0 0
    %145 = vmatprep.subr.bf16.mxu0 0
    %146 = vmatpush1.bf16.msra.mxu0 0
    %147 = vmatprep.subr.bf16.mxu0 0
    %148 = vmatpush1.bf16.msra.mxu0 0
    %149 = vmatprep.subr.bf16.mxu0 0
    %150 = vmatpush1.bf16.msra.mxu0 0
    %151 = vmatprep.subr.bf16.mxu0 0
    %152 = vmatpush1.bf16.msra.mxu0 %v133
    %153 = vmatprep.subr.bf16.mxu0 0
    %154 = vmatpush1.bf16.msra.mxu0 %v132
    %155 = vmatprep.subr.bf16.mxu0 0
    %156 = vmatpush2.bf16.msra.mxu0 0
    %157 = vmatprep.subr.bf16.mxu0 0
    %158 = vmatpush2.bf16.msra.mxu0 0
    %159 = vmatprep.subr.bf16.mxu0 0
    %160 = vmatpush2.bf16.msra.mxu0 0
    %161 = vmatprep.subr.bf16.mxu0 0
    %162 = vmatpush2.bf16.msra.mxu0 0
    %163 = vmatprep.subr.bf16.mxu0 0
    %164 = vmatpush2.bf16.msra.mxu0 0
    %165 = vmatprep.subr.bf16.mxu0 0
    %166 = vmatpush2.bf16.msra.mxu0 0
    %167 = vmatprep.subr.bf16.mxu0 0
    %168 = vmatpush2.bf16.msra.mxu0 0
    %169 = vmatprep.subr.bf16.mxu0 0
    %170 = vmatpush2.bf16.msra.mxu0 0
    %171 = vmatprep.mubr.bf16.mxu0 0
    %172 = vmatmul.mubr.bf16.gmra.mxu0 %v137
    %v173 = vpop.f32.mrf.mxu0
    %v174 = vadd.f32 %v122, %v173
    %v175 = vpop.f32.mrf.mxu0
    %v176 = vpop.f32.mrf.mxu0
    %v177 = vadd.f32 %v122, %v176
    %v178 = vpop.f32.mrf.mxu0
    %179 = vdwg.mxu0
    %v180 = vpack.c.bf16 %v177, %v174
    %v182 = vunpack.c.l.b16 %v180
    %v183 = vunpack.c.h.b16 %v180
    %v184 = vpack.c.b16 %v182, %v182
    %v185 = vpack.c.b16 %v183, %v183
    %vm188 = vcmask 781312
    %189 = vst.msk [vmem:[#allocation7] sm:$0xf] %vm188, %v184
    %190 = vst.msk [vmem:[#allocation7 + $0x4] sm:$0xf] %vm188, %v185
    // Predicated region
    $region30: #{tpu_custom_call.1} parent=1 // pred_check
      _
    $region31: #{tpu_custom_call.1} parent=1 // pred_check_branch
      %192 = sbr.rel (0) target = $region33
    $region32: #{tpu_custom_call.1} parent=1 // pred_region
      %s194 = ssub.s32 128, 128
      %195 = vsyncadd [#allocation4], %s194
      %s196 = sshll.u32 [#allocation7], 4
      %s197 = int_to_ptr.vmem [resolvable:$true] %s196
      %202 = dma.vmem_to_hbm [thread:$0]  %s197, 128, %s5, [#allocation4], 64, 64, 4
    $region33: #{tpu_custom_call.1} parent=1 // pred_fallthru
      _
    // Predicated region
    $region34: #{tpu_custom_call.1} parent=1 // pred_check
      _
    $region35: #{tpu_custom_call.1} parent=1 // pred_check_branch
      %204 = sbr.rel (0) target = $region37
    $region36: #{tpu_custom_call.1} parent=1 // pred_region
      %205 = dma.done [#allocation4], 128
    $region37: #{tpu_custom_call.1} parent=1 // pred_fallthru
      _
    %206 = vsyncpa [#allocation3], 1
    %207 = vsyncpa [#allocation6], 1
    %208 = vsyncpa [#allocation4], 1

</llo_original>
